<compile_context>
chip_gen: v7x
topology: tpu7x:2x2x1
jax: 0.10.0
libtpu: 0.0.40
codegen_flags: <defaults>
</compile_context>

<pallas_src>
import functools

import jax
import jax.numpy as jnp
from jax.experimental import pallas as pl
from jax.experimental.pallas import tpu as pltpu


_LANE = 128


def _round_up(x, m):
    return ((x + m - 1) // m) * m


def _hw_config():
    """Generation-aware VMEM budgets (v5e/v6e: 128 MiB/TC, 1 TC; v7x: 64 MiB/TC, 2 TCs)."""
    try:
        vmem = getattr(pltpu.get_tpu_info(), "vmem_capacity_bytes", 64 << 20)
    except Exception:
        vmem = 64 << 20
    if vmem >= (100 << 20):
        # v5e / v6e: 128 MiB VMEM, single TensorCore -> use it.
        return {
            "a_tile_budget": 40 << 20,      # double-buffered bf16 A tile
            "wt_resident_budget": 32 << 20,  # fully VMEM-resident W^T (hi+lo)
            "vmem_limit": 96 << 20,
            "multi_tc": False,
        }
    # v7x-like (64 MiB per TC, 2 TCs per chip) -- also the safe fallback.
    return {
        "a_tile_budget": 12 << 20,
        "wt_resident_budget": 12 << 20,
        "vmem_limit": 40 << 20,
        "multi_tc": True,
    }


def _choose_tiles(N, num_nodes, cfg):
    """Pick (tm, tk) sized against the VMEM budget.

    On 2-TC parts keep >=2 M tiles so the parallel M axis feeds both cores;
    on single-TC parts just take the biggest M tile.
    """
    nn128 = _round_up(num_nodes, _LANE)

    if cfg["multi_tc"]:
        tm = 128
        for cand in (512, 256):
            if pl.cdiv(N, cand) >= 2:
                tm = cand
                break
    else:
        tm = min(512, _round_up(N, _LANE))

    a_budget = cfg["a_tile_budget"]
    if 2 * tm * nn128 * 2 <= a_budget:      # 2 buffers x bf16
        tk = nn128                           # whole reduction in a single K step
    else:
        tk = 128
        for cand in (4096, 2048, 1024, 512, 256):
            if 2 * tm * cand * 2 <= a_budget:
                tk = cand
                break
    return tm, tk


def _link_kernel(a_ref, wt_hi_ref, wt_lo_ref, b_ref, o_ref, *, tk, wt_resident):
    """One (tm, oc_pad) output tile; accumulates over the K grid axis in o_ref."""
    k = pl.program_id(1)
    a = a_ref[...]                       # bf16, fed straight to the MXU

    if wt_resident:
        # Whole W^T lives in VMEM (constant index_map => DMA'd once); slice out
        # this K tile.  Start is a multiple of tk (itself a multiple of 128).
        start = pl.multiple_of(k * tk, tk)
        wt_hi = wt_hi_ref[pl.ds(start, tk), :]
        wt_lo = wt_lo_ref[pl.ds(start, tk), :]
    else:
        wt_hi = wt_hi_ref[...]
        wt_lo = wt_lo_ref[...]

    # hi/lo bf16 split of the f32 weight: two native bf16 MXU matmuls with f32
    # accumulation reproduce the f32 result (A is exact in bf16) while avoiding
    # the slow multi-pass f32 MXU mode and the f32 A-tile temporary.
    partial = jnp.dot(a, wt_hi, preferred_element_type=jnp.float32)
    partial = partial + jnp.dot(a, wt_lo, preferred_element_type=jnp.float32)

    @pl.when(k == 0)
    def _():
        o_ref[...] = partial + b_ref[...]

    @pl.when(k > 0)
    def _():
        o_ref[...] += partial


@functools.partial(jax.jit, static_argnames=("num_rows",))
def link_forward(edge_index, w, b, *, num_rows):
    """logits = A @ w.T + b with A the dense adjacency built from edge_index.

    edge_index: (2, E) int32
    w         : (out_channels, num_nodes)  (PyTorch Linear convention)
    b         : (out_channels,)
    num_rows  : N, number of rows of A (static).
    """
    out_channels, num_nodes = w.shape
    N = num_rows

    cfg = _hw_config()
    tm, tk = _choose_tiles(N, num_nodes, cfg)
    n_pad = _round_up(N, tm)
    k_pad = _round_up(num_nodes, tk)
    oc_pad = _round_up(max(out_channels, _LANE), _LANE)     # lane-dense output

    m_tiles = n_pad // tm
    k_tiles = k_pad // tk

    # Adjacency born bf16 and born padded: a single scatter pass, no extra
    # cast/pad sweep over the dominant A stream.  Padding rows/cols stay zero.
    row = edge_index[0]
    col = edge_index[1]
    row = row - jnp.min(row)
    a = jnp.zeros((n_pad, k_pad), jnp.bfloat16).at[row, col].add(1.0)

    # hi/lo bf16 split of zero-padded W^T; bias padded to the lane-dense width.
    wt = jnp.zeros((k_pad, oc_pad), jnp.float32).at[:num_nodes, :out_channels].set(w.T)
    wt_hi = wt.astype(jnp.bfloat16)
    wt_lo = (wt - wt_hi.astype(jnp.float32)).astype(jnp.bfloat16)
    b2 = jnp.zeros((1, oc_pad), jnp.float32).at[0, :out_channels].set(b)

    # Keep W^T fully VMEM-resident (no per-M-tile re-stream) when it fits.
    # Footprint: 2 arrays (hi, lo) x 2 pipeline buffers x bf16.
    wt_bytes = 2 * 2 * k_pad * oc_pad * 2
    wt_resident = (k_tiles > 1) and (wt_bytes <= cfg["wt_resident_budget"])
    if wt_resident:
        wt_spec = pl.BlockSpec((k_pad, oc_pad), lambda i, k: (0, 0))
    else:
        wt_spec = pl.BlockSpec((tk, oc_pad), lambda i, k: (k, 0))

    kernel = functools.partial(_link_kernel, tk=tk, wt_resident=wt_resident)

    out = pl.pallas_call(
        kernel,
        out_shape=jax.ShapeDtypeStruct((n_pad, oc_pad), jnp.float32),
        grid_spec=pltpu.PrefetchScalarGridSpec(
            num_scalar_prefetch=0,
            grid=(m_tiles, k_tiles),
            in_specs=[
                pl.BlockSpec((tm, tk), lambda i, k: (i, k)),     # A tile (bf16)
                wt_spec,                                          # W^T hi (bf16)
                wt_spec,                                          # W^T lo (bf16)
                pl.BlockSpec((1, oc_pad), lambda i, k: (0, 0)),   # bias (f32)
            ],
            out_specs=pl.BlockSpec((tm, oc_pad), lambda i, k: (i, 0)),
        ),
        compiler_params=pltpu.CompilerParams(
            dimension_semantics=("parallel", "arbitrary"),
            vmem_limit_bytes=cfg["vmem_limit"],
        ),
    )(a, wt_hi, wt_lo, b2)

    return out[:N, :out_channels]


def _run_case(key, N, num_nodes, out_channels, num_edges):
    k_row, k_col, k_w, k_b = jax.random.split(key, 4)

    row = jax.random.randint(k_row, (num_edges,), 0, N, dtype=jnp.int32)
    col = jax.random.randint(k_col, (num_edges,), 0, num_nodes, dtype=jnp.int32)
    edge_index = jnp.stack([row, col], axis=0)

    bound = 1.0 / (num_nodes ** 0.5)
    W = jax.random.uniform(k_w, (out_channels, num_nodes), jnp.float32, -bound, bound)
    bias = jax.random.uniform(k_b, (out_channels,), jnp.float32, -bound, bound)

    logits = jax.block_until_ready(link_forward(edge_index, W, bias, num_rows=N))

    # f32 dense reference (matches torch sparse COO @ dense semantics,
    # including duplicate-edge summation and the row-min shift).
    r0 = row - jnp.min(row)
    A = jnp.zeros((N, num_nodes), jnp.float32).at[r0, col].add(1.0)
    ref = A @ W.T + bias[None, :]

    assert logits.shape == (N, out_channels)
    assert jnp.allclose(logits, ref, atol=2e-4, rtol=2e-4), "mismatch vs reference"


if __name__ == "__main__":
    key = jax.random.PRNGKey(0)
    k0, k1 = jax.random.split(key)

    # Tile-aligned small problem (K grid collapses to a single step).
    _run_case(k0, N=256, num_nodes=256, out_channels=16, num_edges=1024)

    # Ragged shapes: exercises the zero-padding path.
    _run_case(k1, N=200, num_nodes=300, out_channels=7, num_edges=700)

    print("KERNEL_OK")
</pallas_src>

<mosaic_0001>
module attributes {stable_mosaic.version = 11 : i64} {
  func.func @_link_kernel(%arg0: i32, %arg1: i32, %arg2: memref<128x256xbf16, #tpu.memory_space<vmem>>, %arg3: memref<256x128xbf16, #tpu.memory_space<vmem>>, %arg4: memref<256x128xbf16, #tpu.memory_space<vmem>>, %arg5: memref<1x128xf32, #tpu.memory_space<vmem>>, %arg6: memref<128x128xf32, #tpu.memory_space<vmem>>) attributes {dimension_semantics = [#tpu.dimension_semantics<parallel>, #tpu.dimension_semantics<arbitrary>], iteration_bounds = array<i64: 2, 1>, scalar_prefetch = 0 : i64, scratch_operands = 0 : i64, tpu.core_type = #tpu.core_type<tc>, window_params = [{transform_indices = @transform_0, window_bounds = array<i64: 128, 256>}, {transform_indices = @transform_1, window_bounds = array<i64: 256, 128>}, {transform_indices = @transform_2, window_bounds = array<i64: 256, 128>}, {pipeline_mode = #tpu.pipeline_mode<synchronous>, transform_indices = @transform_3, window_bounds = array<i64: 1, 128>}, {transform_indices = @transform_4, window_bounds = array<i64: 128, 128>}]} {
    %c0 = arith.constant 0 : index
    %c0_0 = arith.constant 0 : index
    %0 = vector.load %arg2[%c0, %c0_0] : memref<128x256xbf16, #tpu.memory_space<vmem>>, vector<128x256xbf16>
    %c0_1 = arith.constant 0 : index
    %c0_2 = arith.constant 0 : index
    %1 = vector.load %arg3[%c0_1, %c0_2] : memref<256x128xbf16, #tpu.memory_space<vmem>>, vector<256x128xbf16>
    %c0_3 = arith.constant 0 : index
    %c0_4 = arith.constant 0 : index
    %2 = vector.load %arg4[%c0_3, %c0_4] : memref<256x128xbf16, #tpu.memory_space<vmem>>, vector<256x128xbf16>
    %cst = arith.constant dense<0.000000e+00> : vector<128x128xf32>
    %3 = tpu.matmul %0, %1, %cst {dimension_numbers = #tpu.dot_dimension_numbers<[1], [0], [0], [1], [0, 0, 1, 1], [], []>} : vector<128x256xbf16>, vector<256x128xbf16>, vector<128x128xf32> -> vector<128x128xf32>
    %cst_5 = arith.constant dense<0.000000e+00> : vector<128x128xf32>
    %4 = tpu.matmul %0, %2, %cst_5 {dimension_numbers = #tpu.dot_dimension_numbers<[1], [0], [0], [1], [0, 0, 1, 1], [], []>} : vector<128x256xbf16>, vector<256x128xbf16>, vector<128x128xf32> -> vector<128x128xf32>
    %5 = arith.addf %3, %4 : vector<128x128xf32>
    %c0_i32 = arith.constant 0 : i32
    %6 = arith.cmpi eq, %arg1, %c0_i32 : i32
    %7 = arith.extui %6 : i1 to i32
    %c0_i32_6 = arith.constant 0 : i32
    %8 = arith.cmpi ne, %7, %c0_i32_6 : i32
    scf.if %8 {
      %c0_9 = arith.constant 0 : index
      %c0_10 = arith.constant 0 : index
      %12 = vector.load %arg5[%c0_9, %c0_10] : memref<1x128xf32, #tpu.memory_space<vmem>>, vector<1x128xf32>
      %13 = vector.broadcast %12 : vector<1x128xf32> to vector<128x128xf32>
      %14 = arith.addf %5, %13 : vector<128x128xf32>
      %c0_11 = arith.constant 0 : index
      %c0_12 = arith.constant 0 : index
      %15 = vector.load %arg6[%c0_11, %c0_12] : memref<128x128xf32, #tpu.memory_space<vmem>>, vector<128x128xf32>
      tpu.vector_store %arg6[%c0_11, %c0_12], %14 {strides = array<i32>} : memref<128x128xf32, #tpu.memory_space<vmem>>, vector<128x128xf32>,
    } else {
    }
    %c0_i32_7 = arith.constant 0 : i32
    %9 = arith.cmpi sgt, %arg1, %c0_i32_7 : i32
    %10 = arith.extui %9 : i1 to i32
    %c0_i32_8 = arith.constant 0 : i32
    %11 = arith.cmpi ne, %10, %c0_i32_8 : i32
    scf.if %11 {
      %c0_9 = arith.constant 0 : index
      %c0_10 = arith.constant 0 : index
      %12 = vector.load %arg6[%c0_9, %c0_10] : memref<128x128xf32, #tpu.memory_space<vmem>>, vector<128x128xf32>
      %13 = arith.addf %12, %5 : vector<128x128xf32>
      %c0_11 = arith.constant 0 : index
      %c0_12 = arith.constant 0 : index
      %14 = vector.load %arg6[%c0_11, %c0_12] : memref<128x128xf32, #tpu.memory_space<vmem>>, vector<128x128xf32>
      tpu.vector_store %arg6[%c0_11, %c0_12], %13 {strides = array<i32>} : memref<128x128xf32, #tpu.memory_space<vmem>>, vector<128x128xf32>,
    } else {
    }
    return
  }
  func.func @transform_0(%arg0: i32, %arg1: i32) -> (i32, i32) {
    %c0_i32 = arith.constant 0 : i32
    return %arg0, %arg1 : i32, i32
  }
  func.func @transform_1(%arg0: i32, %arg1: i32) -> (i32, i32) {
    %c0_i32 = arith.constant 0 : i32
    %c0_i32_0 = arith.constant 0 : i32
    return %arg1, %c0_i32 : i32, i32
  }
  func.func @transform_2(%arg0: i32, %arg1: i32) -> (i32, i32) {
    %c0_i32 = arith.constant 0 : i32
    %c0_i32_0 = arith.constant 0 : i32
    return %arg1, %c0_i32 : i32, i32
  }
  func.func @transform_3(%arg0: i32, %arg1: i32) -> (i32, i32) {
    %c0_i32 = arith.constant 0 : i32
    %c0_i32_0 = arith.constant 0 : i32
    %c0_i32_1 = arith.constant 0 : i32
    return %c0_i32, %c0_i32_0 : i32, i32
  }
  func.func @transform_4(%arg0: i32, %arg1: i32) -> (i32, i32) {
    %c0_i32 = arith.constant 0 : i32
    %c0_i32_0 = arith.constant 0 : i32
    return %arg0, %c0_i32 : i32, i32
  }
}

</mosaic_0001>

<llo_original>
// kernel: link_forward.1
$region0: #{link_forward.1}
  #allocation0 [shape = 'u32[]', space=smem, size = 0x4, offset = 0x4, fixed_abs, tag = 'smem constant byte address 0x4 - core index']
  #allocation1 [shape = 'u32[144,128]{1,0:T(1,128)}', space=vmem, size = 0x12000, scoped, tag = 'internal scratch']
  %s0 = inlined_call_operand.vmem [shape: bf16[256,256], index: 0, kind: input, shape index: {}]
  %s1 = inlined_call_operand.vmem [shape: bf16[256,128], index: 1, kind: input, shape index: {}]
  %s2 = inlined_call_operand.vmem [shape: bf16[256,128], index: 2, kind: input, shape index: {}]
  %s3 = inlined_call_operand.vmem [shape: f32[1,128], index: 3, kind: input, shape index: {}]
  %s4 = inlined_call_operand.vmem [shape: f32[256,128], index: 4, kind: output, shape index: {}]
  %s5 = sld [smem:[#allocation0]]
  $region57: #{link_forward.1} parent=0
    _
  %s7 = ssub.s32 1, %s5
  %s8 = scalar_select 0, %s7, %s5
  loop: start=0, step=1, limit=4
  $region2: #{link_forward.1} parent=0 // loop_pre_header
    _
  $region3: #{link_forward.1} parent=0 // loop_header
    %s10 = sphi 0, %s14
    %p11 = scmp.ge.s32.totalorder %s10, 4
    %s17 = sphi 0, %s29
    %s18 = sphi 0, %s25
    %s19 = sphi 0, %s17
    %s20 = sphi 0, %s18
    %s21 = sphi 0, %s19
    %s22 = sphi 0, %s20
    %s34 = sphi 0, %s36
    %s37 = sphi 0, %s34
    %s38 = sphi 0, %s37
    %s54 = sphi 0, %s38
    %s60 = sphi 0, %s62
    %s63 = sphi 0, %s60
    %s64 = sphi 0, %s63
    %s80 = sphi 0, %s64
    %s86 = sphi 0, %s88
    %s89 = sphi 0, %s86
    %s90 = sphi 0, %s89
    %s106 = sphi 0, %s90
    %s110 = sphi 0, %s110
    %s112 = sphi 0, %s110
    %s113 = sphi 0, %s112
    %s127 = sphi 0, %s113
    %s133 = sphi 0, %s135
    %s136 = sphi 0, %s133
    %s137 = sphi 0, %s136
    %s153 = sphi 0, %s137
  $region4: #{link_forward.1} parent=0 // loop_header_branch
    %13 = sbr.rel (%p11) target = $region8
  $region5: #{link_forward.1} parent=0 // loop_body
    %s15 = ssub.s32 %s10, 1
    %s16 = ssub.s32 %s10, 2
    %s23 = sadd.s32 1, %s18
    %p24 = scmp.ge.s32.totalorder %s23, 1
    %s25 = scalar_select %p24, 0, %s23
    %s26 = sadd.s32 1, %s17
    %s27 = scalar_select %p24, %s26, %s17
    %p28 = scmp.ge.s32.totalorder %s27, 2
    %s29 = scalar_select %p28, 0, %s27
    %s30 = ssub.s32 %s17, %s29
    %s31 = ssub.s32 %s18, %s25
    %s32 = sor.u32 %s30, %s31
    %p33 = scmp.eq.s32.totalorder %s32, 0
    %s35 = sadd.s32 %s34, 1
    %s36 = scalar_select %p33, %s34, %s35
    %p39 = pneg %p33
    %p40 = scmp.eq.s32.totalorder %s10, 1
    %p41 = por %p39, %p40
    %p42 = scmp.ne.s32.totalorder %s34, %s37
    %p43 = scmp.eq.s32.totalorder %s10, 0
    %p44 = por %p42, %p43
    %p45 = scmp.ne.s32.totalorder %s34, %s37
    %p46 = scmp.eq.s32.totalorder %s15, 1
    %p47 = por %p45, %p46
    %p48 = scmp.ne.s32.totalorder %s37, %s38
    %p49 = scmp.eq.s32.totalorder %s15, 0
    %p50 = por %p48, %p49
    %p51 = scmp.ne.s32.totalorder %s37, %s38
    %p52 = scmp.eq.s32.totalorder %s16, 1
    %p53 = por %p51, %p52
    %p55 = scmp.ne.s32.totalorder %s38, %s54
    %p56 = scmp.eq.s32.totalorder %s16, 0
    %p57 = por %p55, %p56
    %s58 = ssub.s32 %s18, %s25
    %p59 = scmp.eq.s32.totalorder %s58, 0
    %s61 = sadd.s32 %s60, 1
    %s62 = scalar_select %p59, %s60, %s61
    %p65 = pneg %p59
    %p66 = scmp.eq.s32.totalorder %s10, 1
    %p67 = por %p65, %p66
    %p68 = scmp.ne.s32.totalorder %s60, %s63
    %p69 = scmp.eq.s32.totalorder %s10, 0
    %p70 = por %p68, %p69
    %p71 = scmp.ne.s32.totalorder %s60, %s63
    %p72 = scmp.eq.s32.totalorder %s15, 1
    %p73 = por %p71, %p72
    %p74 = scmp.ne.s32.totalorder %s63, %s64
    %p75 = scmp.eq.s32.totalorder %s15, 0
    %p76 = por %p74, %p75
    %p77 = scmp.ne.s32.totalorder %s63, %s64
    %p78 = scmp.eq.s32.totalorder %s16, 1
    %p79 = por %p77, %p78
    %p81 = scmp.ne.s32.totalorder %s64, %s80
    %p82 = scmp.eq.s32.totalorder %s16, 0
    %p83 = por %p81, %p82
    %s84 = ssub.s32 %s18, %s25
    %p85 = scmp.eq.s32.totalorder %s84, 0
    %s87 = sadd.s32 %s86, 1
    %s88 = scalar_select %p85, %s86, %s87
    %p91 = pneg %p85
    %p92 = scmp.eq.s32.totalorder %s10, 1
    %p93 = por %p91, %p92
    %p94 = scmp.ne.s32.totalorder %s86, %s89
    %p95 = scmp.eq.s32.totalorder %s10, 0
    %p96 = por %p94, %p95
    %p97 = scmp.ne.s32.totalorder %s86, %s89
    %p98 = scmp.eq.s32.totalorder %s15, 1
    %p99 = por %p97, %p98
    %p100 = scmp.ne.s32.totalorder %s89, %s90
    %p101 = scmp.eq.s32.totalorder %s15, 0
    %p102 = por %p100, %p101
    %p103 = scmp.ne.s32.totalorder %s89, %s90
    %p104 = scmp.eq.s32.totalorder %s16, 1
    %p105 = por %p103, %p104
    %p107 = scmp.ne.s32.totalorder %s90, %s106
    %p108 = scmp.eq.s32.totalorder %s16, 0
    %p109 = por %p107, %p108
    %s111 = sadd.s32 %s110, 1
    %p114 = scmp.eq.s32.totalorder %s10, 1
    %p115 = scmp.ne.s32.totalorder %s110, %s112
    %p116 = scmp.eq.s32.totalorder %s10, 0
    %p117 = por %p115, %p116
    %p118 = scmp.ne.s32.totalorder %s110, %s112
    %p119 = scmp.eq.s32.totalorder %s15, 1
    %p120 = por %p118, %p119
    %p121 = scmp.ne.s32.totalorder %s112, %s113
    %p122 = scmp.eq.s32.totalorder %s15, 0
    %p123 = por %p121, %p122
    %p124 = scmp.ne.s32.totalorder %s112, %s113
    %p125 = scmp.eq.s32.totalorder %s16, 1
    %p126 = por %p124, %p125
    %p128 = scmp.ne.s32.totalorder %s113, %s127
    %p129 = scmp.eq.s32.totalorder %s16, 0
    %p130 = por %p128, %p129
    %s131 = ssub.s32 %s17, %s29
    %p132 = scmp.eq.s32.totalorder %s131, 0
    %s134 = sadd.s32 %s133, 1
    %s135 = scalar_select %p132, %s133, %s134
    %p138 = pneg %p132
    %p139 = scmp.eq.s32.totalorder %s10, 1
    %p140 = por %p138, %p139
    %p141 = scmp.ne.s32.totalorder %s133, %s136
    %p142 = scmp.eq.s32.totalorder %s10, 0
    %p143 = por %p141, %p142
    %p144 = scmp.ne.s32.totalorder %s133, %s136
    %p145 = scmp.eq.s32.totalorder %s15, 1
    %p146 = por %p144, %p145
    %p147 = scmp.ne.s32.totalorder %s136, %s137
    %p148 = scmp.eq.s32.totalorder %s15, 0
    %p149 = por %p147, %p148
    %p150 = scmp.ne.s32.totalorder %s136, %s137
    %p151 = scmp.eq.s32.totalorder %s16, 1
    %p152 = por %p150, %p151
    %p154 = scmp.ne.s32.totalorder %s137, %s153
    %p155 = scmp.eq.s32.totalorder %s16, 0
    %p156 = por %p154, %p155
    %p157 = scmp.le.s32.totalorder 1, %s10
    %p158 = scmp.lt.s32.totalorder %s10, 3
    %p159 = pnand %p157, %p158
    %p160 = pneg %p159
    // Predicated region
    $region9: #{link_forward.1} parent=5 // pred_check
      _
    $region10: #{link_forward.1} parent=5 // pred_check_branch
      %162 = sbr.rel (%p159) target = $region12
    $region11: #{link_forward.1} parent=5 // pred_region
      %s163 = ssub.s32 %s10, 1
      // Predicated region
      $region13: #{link_forward.1} parent=11 // pred_check
        %p164 = pneg %p76
      $region14: #{link_forward.1} parent=11 // pred_check_branch
        %166 = sbr.rel (%p164) target = $region16
      $region15: #{link_forward.1} parent=11 // pred_region
        %s167 = smul.u32 32, %s20
        %p168 = scmp.lt.s32.totalorder %s167, 31
        %s169 = scalar_select %p168, %s167, 31
        %s170 = smul.addr %s169, 4
        %s171 = scalar_lea.vmem %s1, %s170
        %s172 = smul.u32 32, %s20
      $region16: #{link_forward.1} parent=11 // pred_fallthru
        _
      // Predicated region
      $region17: #{link_forward.1} parent=11 // pred_check
        %p173 = pneg %p102
      $region18: #{link_forward.1} parent=11 // pred_check_branch
        %175 = sbr.rel (%p173) target = $region20
      $region19: #{link_forward.1} parent=11 // pred_region
        %s176 = smul.u32 32, %s20
        %p177 = scmp.lt.s32.totalorder %s176, 31
        %s178 = scalar_select %p177, %s176, 31
        %s179 = smul.addr %s178, 4
        %s180 = scalar_lea.vmem %s2, %s179
        %s181 = smul.u32 32, %s20
      $region20: #{link_forward.1} parent=11 // pred_fallthru
        _
      // Predicated region
      $region21: #{link_forward.1} parent=11 // pred_check
        %p182 = pneg %p123
      $region22: #{link_forward.1} parent=11 // pred_check_branch
        %184 = sbr.rel (%p182) target = $region24
      $region23: #{link_forward.1} parent=11 // pred_region
        _
      $region24: #{link_forward.1} parent=11 // pred_fallthru
        _
    $region12: #{link_forward.1} parent=5 // pred_fallthru
      _
    %p185 = scmp.lt.s32.totalorder %s10, 2
    // Predicated region
    $region25: #{link_forward.1} parent=5 // pred_check
      %p186 = pneg %p185
    $region26: #{link_forward.1} parent=5 // pred_check_branch
      %188 = sbr.rel (%p186) target = $region28
    $region27: #{link_forward.1} parent=5 // pred_region
      // Predicated region
      $region29: #{link_forward.1} parent=27 // pred_check
        %p189 = pneg %p44
      $region30: #{link_forward.1} parent=27 // pred_check_branch
        %191 = sbr.rel (%p189) target = $region32
      $region31: #{link_forward.1} parent=27 // pred_region
        %s192 = smul.u32 16, %s17
        %s193 = smul.u32 2, %s18
        %p194 = scmp.lt.s32.totalorder %s192, 31
        %s195 = scalar_select %p194, %s192, 31
        %p196 = scmp.lt.s32.totalorder %s193, 1
        %s197 = scalar_select %p196, %s193, 1
        %s198 = smul.addr %s195, 2
        %s199 = sadd.s32 %s197, %s198
        %s200 = smul.addr %s199, 4
        %s201 = scalar_lea.vmem %s0, %s200
        %s202 = smul.u32 16, %s17
        %s203 = smul.u32 2, %s18
      $region32: #{link_forward.1} parent=27 // pred_fallthru
        _
    $region28: #{link_forward.1} parent=5 // pred_fallthru
      _
    %p204 = scmp.le.s32.totalorder 1, %s10
    %p205 = scmp.lt.s32.totalorder %s10, 3
    %p206 = pnand %p204, %p205
    %p207 = pneg %p206
    // Predicated region
    $region33: #{link_forward.1} parent=5 // pred_check
      _
    $region34: #{link_forward.1} parent=5 // pred_check_branch
      %209 = sbr.rel (%p206) target = $region36
    $region35: #{link_forward.1} parent=5 // pred_region
      %s210 = ssub.s32 %s10, 1
      %s211 = smul.u32 16, %s19
      %s212 = smul.u32 2, %s20
      %p213 = scmp.lt.s32.totalorder %s211, 31
      %s214 = scalar_select %p213, %s211, 31
      %p215 = scmp.lt.s32.totalorder %s212, 1
      %s216 = scalar_select %p215, %s212, 1
      %s217 = smul.addr %s214, 2
      %s218 = sadd.s32 %s216, %s217
      %s219 = smul.addr %s218, 4
      %s220 = scalar_lea.vmem %s0, %s219
      %p221 = pneg %p50
      %p222 = pneg %p47
      %s223 = smul.u32 32, %s20
      %p224 = scmp.lt.s32.totalorder %s223, 31
      %s225 = scalar_select %p224, %s223, 31
      %s226 = smul.addr %s225, 4
      %s227 = scalar_lea.vmem %s1, %s226
      %p228 = pneg %p76
      %p229 = pneg %p73
      %s230 = smul.u32 32, %s20
      %p231 = scmp.lt.s32.totalorder %s230, 31
      %s232 = scalar_select %p231, %s230, 31
      %s233 = smul.addr %s232, 4
      %s234 = scalar_lea.vmem %s2, %s233
      %p235 = pneg %p102
      %p236 = pneg %p99
      %p237 = pneg %p123
      %p238 = pneg %p120
      %p239 = pneg %p149
      %p240 = pneg %p146
      %s241 = smul.u32 16, %s19
      %p242 = scmp.lt.s32.totalorder %s241, 31
      %s243 = scalar_select %p242, %s241, 31
      %s244 = smul.addr %s243, 8
      %s245 = scalar_lea.vmem %s4, %s244
      %s246 = smul.u32 16, %s19
      %s247 = smul.u32 2, %s20
      %p248 = scmp.lt.s32.totalorder %s246, 31
      %s249 = scalar_select %p248, %s246, 31
      %p250 = scmp.lt.s32.totalorder %s247, 1
      %s251 = scalar_select %p250, %s247, 1
      %s252 = smul.addr %s249, 2
      %s253 = sadd.s32 %s251, %s252
      %s254 = smul.addr %s253, 4
      %s255 = scalar_lea.vmem %s0, %s254
      %s256 = smul.u32 16, %s19
      %s257 = smul.u32 2, %s20
      %s258 = smul.u32 32, %s20
      %p259 = scmp.lt.s32.totalorder %s258, 31
      %s260 = scalar_select %p259, %s258, 31
      %s261 = smul.addr %s260, 4
      %s262 = scalar_lea.vmem %s1, %s261
      %s263 = smul.u32 32, %s20
      %s264 = smul.u32 32, %s20
      %p265 = scmp.lt.s32.totalorder %s264, 31
      %s266 = scalar_select %p265, %s264, 31
      %s267 = smul.addr %s266, 4
      %s268 = scalar_lea.vmem %s2, %s267
      %s269 = smul.u32 32, %s20
      %s270 = smul.u32 16, %s19
      %p271 = scmp.lt.s32.totalorder %s270, 31
      %s272 = scalar_select %p271, %s270, 31
      %s273 = smul.addr %s272, 8
      %s274 = scalar_lea.vmem %s4, %s273
      %s275 = smul.u32 16, %s19
      %v277 = vld [vmem:[%s255] sm:$0xff]
      %v278 = vld [vmem:[%s255 + $0x8] sm:$0xff]
      %v279 = vld [vmem:[%s255 + $0x10] sm:$0xff]
      %v280 = vld [vmem:[%s255 + $0x18] sm:$0xff]
      %v281 = vld [vmem:[%s255 + $0x20] sm:$0xff]
      %v282 = vld [vmem:[%s255 + $0x28] sm:$0xff]
      %v283 = vld [vmem:[%s255 + $0x30] sm:$0xff]
      %v284 = vld [vmem:[%s255 + $0x38] sm:$0xff]
      %v285 = vld [vmem:[%s255 + $0x40] sm:$0xff]
      %v286 = vld [vmem:[%s255 + $0x48] sm:$0xff]
      %v287 = vld [vmem:[%s255 + $0x50] sm:$0xff]
      %v288 = vld [vmem:[%s255 + $0x58] sm:$0xff]
      %v289 = vld [vmem:[%s255 + $0x60] sm:$0xff]
      %v290 = vld [vmem:[%s255 + $0x68] sm:$0xff]
      %v291 = vld [vmem:[%s255 + $0x70] sm:$0xff]
      %v292 = vld [vmem:[%s255 + $0x78] sm:$0xff]
      %v293 = vld [vmem:[%s262] sm:$0xf]
      %v294 = vld [vmem:[%s262 + $0x4] sm:$0xf]
      %v295 = vld [vmem:[%s262 + $0x8] sm:$0xf]
      %v296 = vld [vmem:[%s262 + $0xc] sm:$0xf]
      %v297 = vld [vmem:[%s262 + $0x10] sm:$0xf]
      %v298 = vld [vmem:[%s262 + $0x14] sm:$0xf]
      %v299 = vld [vmem:[%s262 + $0x18] sm:$0xf]
      %v300 = vld [vmem:[%s262 + $0x1c] sm:$0xf]
      %v301 = vld [vmem:[%s262 + $0x20] sm:$0xf]
      %v302 = vld [vmem:[%s262 + $0x24] sm:$0xf]
      %v303 = vld [vmem:[%s262 + $0x28] sm:$0xf]
      %v304 = vld [vmem:[%s262 + $0x2c] sm:$0xf]
      %v305 = vld [vmem:[%s262 + $0x30] sm:$0xf]
      %v306 = vld [vmem:[%s262 + $0x34] sm:$0xf]
      %v307 = vld [vmem:[%s262 + $0x38] sm:$0xf]
      %v308 = vld [vmem:[%s262 + $0x3c] sm:$0xf]
      %v309 = vld [vmem:[%s262 + $0x40] sm:$0xf]
      %v310 = vld [vmem:[%s262 + $0x44] sm:$0xf]
      %v311 = vld [vmem:[%s262 + $0x48] sm:$0xf]
      %v312 = vld [vmem:[%s262 + $0x4c] sm:$0xf]
      %v313 = vld [vmem:[%s262 + $0x50] sm:$0xf]
      %v314 = vld [vmem:[%s262 + $0x54] sm:$0xf]
      %v315 = vld [vmem:[%s262 + $0x58] sm:$0xf]
      %v316 = vld [vmem:[%s262 + $0x5c] sm:$0xf]
      %v317 = vld [vmem:[%s262 + $0x60] sm:$0xf]
      %v318 = vld [vmem:[%s262 + $0x64] sm:$0xf]
      %v319 = vld [vmem:[%s262 + $0x68] sm:$0xf]
      %v320 = vld [vmem:[%s262 + $0x6c] sm:$0xf]
      %v321 = vld [vmem:[%s262 + $0x70] sm:$0xf]
      %v322 = vld [vmem:[%s262 + $0x74] sm:$0xf]
      %v323 = vld [vmem:[%s262 + $0x78] sm:$0xf]
      %v324 = vld [vmem:[%s262 + $0x7c] sm:$0xf]
      %v325 = vld [vmem:[%s268] sm:$0xf]
      %v326 = vld [vmem:[%s268 + $0x4] sm:$0xf]
      %v327 = vld [vmem:[%s268 + $0x8] sm:$0xf]
      %v328 = vld [vmem:[%s268 + $0xc] sm:$0xf]
      %v329 = vld [vmem:[%s268 + $0x10] sm:$0xf]
      %v330 = vld [vmem:[%s268 + $0x14] sm:$0xf]
      %v331 = vld [vmem:[%s268 + $0x18] sm:$0xf]
      %v332 = vld [vmem:[%s268 + $0x1c] sm:$0xf]
      %v333 = vld [vmem:[%s268 + $0x20] sm:$0xf]
      %v334 = vld [vmem:[%s268 + $0x24] sm:$0xf]
      %v335 = vld [vmem:[%s268 + $0x28] sm:$0xf]
      %v336 = vld [vmem:[%s268 + $0x2c] sm:$0xf]
      %v337 = vld [vmem:[%s268 + $0x30] sm:$0xf]
      %v338 = vld [vmem:[%s268 + $0x34] sm:$0xf]
      %v339 = vld [vmem:[%s268 + $0x38] sm:$0xf]
      %v340 = vld [vmem:[%s268 + $0x3c] sm:$0xf]
      %v341 = vld [vmem:[%s268 + $0x40] sm:$0xf]
      %v342 = vld [vmem:[%s268 + $0x44] sm:$0xf]
      %v343 = vld [vmem:[%s268 + $0x48] sm:$0xf]
      %v344 = vld [vmem:[%s268 + $0x4c] sm:$0xf]
      %v345 = vld [vmem:[%s268 + $0x50] sm:$0xf]
      %v346 = vld [vmem:[%s268 + $0x54] sm:$0xf]
      %v347 = vld [vmem:[%s268 + $0x58] sm:$0xf]
      %v348 = vld [vmem:[%s268 + $0x5c] sm:$0xf]
      %v349 = vld [vmem:[%s268 + $0x60] sm:$0xf]
      %v350 = vld [vmem:[%s268 + $0x64] sm:$0xf]
      %v351 = vld [vmem:[%s268 + $0x68] sm:$0xf]
      %v352 = vld [vmem:[%s268 + $0x6c] sm:$0xf]
      %v353 = vld [vmem:[%s268 + $0x70] sm:$0xf]
      %v354 = vld [vmem:[%s268 + $0x74] sm:$0xf]
      %v355 = vld [vmem:[%s268 + $0x78] sm:$0xf]
      %v356 = vld [vmem:[%s268 + $0x7c] sm:$0xf]
      %v373 = vunpack.c.l.b16 %v277
      %v374 = vunpack.c.h.b16 %v277
      %v375 = vunpack.c.l.b16 %v278
      %v376 = vunpack.c.h.b16 %v278
      %v377 = vunpack.c.l.b16 %v279
      %v378 = vunpack.c.h.b16 %v279
      %v379 = vunpack.c.l.b16 %v280
      %v380 = vunpack.c.h.b16 %v280
      %v381 = vunpack.c.l.b16 %v281
      %v382 = vunpack.c.h.b16 %v281
      %v383 = vunpack.c.l.b16 %v282
      %v384 = vunpack.c.h.b16 %v282
      %v385 = vunpack.c.l.b16 %v283
      %v386 = vunpack.c.h.b16 %v283
      %v387 = vunpack.c.l.b16 %v284
      %v388 = vunpack.c.h.b16 %v284
      %v389 = vunpack.c.l.b16 %v285
      %v390 = vunpack.c.h.b16 %v285
      %v391 = vunpack.c.l.b16 %v286
      %v392 = vunpack.c.h.b16 %v286
      %v393 = vunpack.c.l.b16 %v287
      %v394 = vunpack.c.h.b16 %v287
      %v395 = vunpack.c.l.b16 %v288
      %v396 = vunpack.c.h.b16 %v288
      %v397 = vunpack.c.l.b16 %v289
      %v398 = vunpack.c.h.b16 %v289
      %v399 = vunpack.c.l.b16 %v290
      %v400 = vunpack.c.h.b16 %v290
      %v401 = vunpack.c.l.b16 %v291
      %v402 = vunpack.c.h.b16 %v291
      %v403 = vunpack.c.l.b16 %v292
      %v404 = vunpack.c.h.b16 %v292
      %v405 = vpack.c.b16 %v375, %v373
      %v406 = vpack.c.b16 %v376, %v374
      %v407 = vpack.c.b16 %v379, %v377
      %v408 = vpack.c.b16 %v380, %v378
      %v409 = vpack.c.b16 %v383, %v381
      %v410 = vpack.c.b16 %v384, %v382
      %v411 = vpack.c.b16 %v387, %v385
      %v412 = vpack.c.b16 %v388, %v386
      %v413 = vpack.c.b16 %v391, %v389
      %v414 = vpack.c.b16 %v392, %v390
      %v415 = vpack.c.b16 %v395, %v393
      %v416 = vpack.c.b16 %v396, %v394
      %v417 = vpack.c.b16 %v399, %v397
      %v418 = vpack.c.b16 %v400, %v398
      %v419 = vpack.c.b16 %v403, %v401
      %v420 = vpack.c.b16 %v404, %v402
      %v469 = vunpack.c.l.b16 %v325
      %v470 = vunpack.c.l.b16 %v326
      %v471 = vunpack.c.l.b16 %v327
      %v472 = vunpack.c.l.b16 %v328
      %v473 = vunpack.c.l.b16 %v329
      %v474 = vunpack.c.l.b16 %v330
      %v475 = vunpack.c.l.b16 %v331
      %v476 = vunpack.c.l.b16 %v332
      %v477 = vunpack.c.l.b16 %v333
      %v478 = vunpack.c.l.b16 %v334
      %v479 = vunpack.c.l.b16 %v335
      %v480 = vunpack.c.l.b16 %v336
      %v481 = vunpack.c.l.b16 %v337
      %v482 = vunpack.c.l.b16 %v338
      %v483 = vunpack.c.l.b16 %v339
      %v484 = vunpack.c.l.b16 %v340
      %v485 = vunpack.c.l.b16 %v341
      %v486 = vunpack.c.l.b16 %v342
      %v487 = vunpack.c.l.b16 %v343
      %v488 = vunpack.c.l.b16 %v344
      %v489 = vunpack.c.l.b16 %v345
      %v490 = vunpack.c.l.b16 %v346
      %v491 = vunpack.c.l.b16 %v347
      %v492 = vunpack.c.l.b16 %v348
      %v493 = vunpack.c.l.b16 %v349
      %v494 = vunpack.c.l.b16 %v350
      %v495 = vunpack.c.l.b16 %v351
      %v496 = vunpack.c.l.b16 %v352
      %v497 = vunpack.c.l.b16 %v353
      %v498 = vunpack.c.l.b16 %v354
      %v499 = vunpack.c.l.b16 %v355
      %v500 = vunpack.c.l.b16 %v356
      %v501 = vpack.c.b16 %v470, %v469
      %v502 = vpack.c.b16 %v472, %v471
      %v503 = vpack.c.b16 %v474, %v473
      %v504 = vpack.c.b16 %v476, %v475
      %v505 = vpack.c.b16 %v478, %v477
      %v506 = vpack.c.b16 %v480, %v479
      %v507 = vpack.c.b16 %v482, %v481
      %v508 = vpack.c.b16 %v484, %v483
      %v509 = vpack.c.b16 %v486, %v485
      %v510 = vpack.c.b16 %v488, %v487
      %v511 = vpack.c.b16 %v490, %v489
      %v512 = vpack.c.b16 %v492, %v491
      %v513 = vpack.c.b16 %v494, %v493
      %v514 = vpack.c.b16 %v496, %v495
      %v515 = vpack.c.b16 %v498, %v497
      %v516 = vpack.c.b16 %v500, %v499
      %533 = vmatprep.subr.bf16.mxu0 0
      %534 = vmatpush1.bf16.msra.mxu0 %v501
      %535 = vmatprep.subr.bf16.mxu0 0
      %536 = vmatpush1.bf16.msra.mxu0 %v502
      %537 = vmatprep.subr.bf16.mxu0 0
      %538 = vmatpush1.bf16.msra.mxu0 %v503
      %539 = vmatprep.subr.bf16.mxu0 0
      %540 = vmatpush1.bf16.msra.mxu0 %v504
      %541 = vmatprep.subr.bf16.mxu0 0
      %542 = vmatpush1.bf16.msra.mxu0 %v505
      %543 = vmatprep.subr.bf16.mxu0 0
      %544 = vmatpush1.bf16.msra.mxu0 %v506
      %545 = vmatprep.subr.bf16.mxu0 0
      %546 = vmatpush1.bf16.msra.mxu0 %v507
      %547 = vmatprep.subr.bf16.mxu0 0
      %548 = vmatpush1.bf16.msra.mxu0 %v508
      %549 = vmatprep.subr.bf16.mxu0 0
      %550 = vmatpush1.bf16.msra.mxu0 %v509
      %551 = vmatprep.subr.bf16.mxu0 0
      %552 = vmatpush1.bf16.msra.mxu0 %v510
      %553 = vmatprep.subr.bf16.mxu0 0
      %554 = vmatpush1.bf16.msra.mxu0 %v511
      %555 = vmatprep.subr.bf16.mxu0 0
      %556 = vmatpush1.bf16.msra.mxu0 %v512
      %557 = vmatprep.subr.bf16.mxu0 0
      %558 = vmatpush1.bf16.msra.mxu0 %v513
      %559 = vmatprep.subr.bf16.mxu0 0
      %560 = vmatpush1.bf16.msra.mxu0 %v514
      %561 = vmatprep.subr.bf16.mxu0 0
      %562 = vmatpush1.bf16.msra.mxu0 %v515
      %563 = vmatprep.subr.bf16.mxu0 0
      %564 = vmatpush1.bf16.msra.mxu0 %v516
      %565 = vmatprep.mubr.bf16.mxu0 %v406
      %566 = vmatmul.mubr.bf16.gmra.mrb[0].mxu0 %v405
      %v567 = vpop.f32.mrb[0].mxu0
      %v568 = vadd.f32 0.0, %v567
      %v569 = vpop.f32.mrb[0].mxu0
      %v570 = vpop.f32.mrb[0].mxu0
      %v571 = vadd.f32 0.0, %v570
      %v572 = vpop.f32.mrb[0].mxu0
      %573 = vmatprep.mubr.bf16.mxu0 %v408
      %574 = vmatmul.mubr.bf16.gmra.mrb[0].mxu0 %v407
      %v575 = vpop.f32.mrb[0].mxu0
      %v576 = vadd.f32 0.0, %v575
      %v577 = vpop.f32.mrb[0].mxu0
      %v578 = vpop.f32.mrb[0].mxu0
      %v579 = vadd.f32 0.0, %v578
      %v580 = vpop.f32.mrb[0].mxu0
      %581 = vmatprep.mubr.bf16.mxu0 %v410
      %582 = vmatmul.mubr.bf16.gmra.mrb[0].mxu0 %v409
      %v583 = vpop.f32.mrb[0].mxu0
      %v584 = vadd.f32 0.0, %v583
      %v585 = vpop.f32.mrb[0].mxu0
      %v586 = vpop.f32.mrb[0].mxu0
      %v587 = vadd.f32 0.0, %v586
      %v588 = vpop.f32.mrb[0].mxu0
      %589 = vmatprep.mubr.bf16.mxu0 %v412
      %590 = vmatmul.mubr.bf16.gmra.mrb[0].mxu0 %v411
      %v591 = vpop.f32.mrb[0].mxu0
      %v592 = vadd.f32 0.0, %v591
      %v593 = vpop.f32.mrb[0].mxu0
      %v594 = vpop.f32.mrb[0].mxu0
      %v595 = vadd.f32 0.0, %v594
      %v596 = vpop.f32.mrb[0].mxu0
      %597 = vmatprep.mubr.bf16.mxu0 %v414
      %598 = vmatmul.mubr.bf16.gmra.mrb[0].mxu0 %v413
      %v599 = vpop.f32.mrb[0].mxu0
      %v600 = vadd.f32 0.0, %v599
      %v601 = vpop.f32.mrb[0].mxu0
      %v602 = vpop.f32.mrb[0].mxu0
      %v603 = vadd.f32 0.0, %v602
      %v604 = vpop.f32.mrb[0].mxu0
      %605 = vmatprep.mubr.bf16.mxu0 %v416
      %606 = vmatmul.mubr.bf16.gmra.mrb[0].mxu0 %v415
      %v607 = vpop.f32.mrb[0].mxu0
      %v608 = vadd.f32 0.0, %v607
      %v609 = vpop.f32.mrb[0].mxu0
      %v610 = vpop.f32.mrb[0].mxu0
      %v611 = vadd.f32 0.0, %v610
      %v612 = vpop.f32.mrb[0].mxu0
      %613 = vmatprep.mubr.bf16.mxu0 %v418
      %614 = vmatmul.mubr.bf16.gmra.mrb[0].mxu0 %v417
      %v615 = vpop.f32.mrb[0].mxu0
      %v616 = vadd.f32 0.0, %v615
      %v617 = vpop.f32.mrb[0].mxu0
      %v618 = vpop.f32.mrb[0].mxu0
      %v619 = vadd.f32 0.0, %v618
      %v620 = vpop.f32.mrb[0].mxu0
      %621 = vmatprep.mubr.bf16.mxu0 %v420
      %622 = vmatmul.mubr.bf16.gmra.mrb[0].mxu0 %v419
      %v623 = vpop.f32.mrb[0].mxu0
      %v624 = vadd.f32 0.0, %v623
      %v625 = vpop.f32.mrb[0].mxu0
      %v626 = vpop.f32.mrb[0].mxu0
      %v627 = vadd.f32 0.0, %v626
      %v628 = vpop.f32.mrb[0].mxu0
      %629 = vdwg.mxu0
      %v662 = vunpack.c.l.b16 %v293
      %v663 = vunpack.c.l.b16 %v294
      %v664 = vunpack.c.l.b16 %v295
      %v665 = vunpack.c.l.b16 %v296
      %v666 = vunpack.c.l.b16 %v297
      %v667 = vunpack.c.l.b16 %v298
      %v668 = vunpack.c.l.b16 %v299
      %v669 = vunpack.c.l.b16 %v300
      %v670 = vunpack.c.l.b16 %v301
      %v671 = vunpack.c.l.b16 %v302
      %v672 = vunpack.c.l.b16 %v303
      %v673 = vunpack.c.l.b16 %v304
      %v674 = vunpack.c.l.b16 %v305
      %v675 = vunpack.c.l.b16 %v306
      %v676 = vunpack.c.l.b16 %v307
      %v677 = vunpack.c.l.b16 %v308
      %v678 = vunpack.c.l.b16 %v309
      %v679 = vunpack.c.l.b16 %v310
      %v680 = vunpack.c.l.b16 %v311
      %v681 = vunpack.c.l.b16 %v312
      %v682 = vunpack.c.l.b16 %v313
      %v683 = vunpack.c.l.b16 %v314
      %v684 = vunpack.c.l.b16 %v315
      %v685 = vunpack.c.l.b16 %v316
      %v686 = vunpack.c.l.b16 %v317
      %v687 = vunpack.c.l.b16 %v318
      %v688 = vunpack.c.l.b16 %v319
      %v689 = vunpack.c.l.b16 %v320
      %v690 = vunpack.c.l.b16 %v321
      %v691 = vunpack.c.l.b16 %v322
      %v692 = vunpack.c.l.b16 %v323
      %v693 = vunpack.c.l.b16 %v324
      %v694 = vpack.c.b16 %v663, %v662
      %v695 = vpack.c.b16 %v665, %v664
      %v696 = vpack.c.b16 %v667, %v666
      %v697 = vpack.c.b16 %v669, %v668
      %v698 = vpack.c.b16 %v671, %v670
      %v699 = vpack.c.b16 %v673, %v672
      %v700 = vpack.c.b16 %v675, %v674
      %v701 = vpack.c.b16 %v677, %v676
      %v702 = vpack.c.b16 %v679, %v678
      %v703 = vpack.c.b16 %v681, %v680
      %v704 = vpack.c.b16 %v683, %v682
      %v705 = vpack.c.b16 %v685, %v684
      %v706 = vpack.c.b16 %v687, %v686
      %v707 = vpack.c.b16 %v689, %v688
      %v708 = vpack.c.b16 %v691, %v690
      %v709 = vpack.c.b16 %v693, %v692
      %726 = vmatprep.subr.bf16.mxu0 0
      %727 = vmatpush1.bf16.msra.mxu0 %v694
      %728 = vmatprep.subr.bf16.mxu0 0
      %729 = vmatpush1.bf16.msra.mxu0 %v695
      %730 = vmatprep.subr.bf16.mxu0 0
      %731 = vmatpush1.bf16.msra.mxu0 %v696
      %732 = vmatprep.subr.bf16.mxu0 0
      %733 = vmatpush1.bf16.msra.mxu0 %v697
      %734 = vmatprep.subr.bf16.mxu0 0
      %735 = vmatpush1.bf16.msra.mxu0 %v698
      %736 = vmatprep.subr.bf16.mxu0 0
      %737 = vmatpush1.bf16.msra.mxu0 %v699
      %738 = vmatprep.subr.bf16.mxu0 0
      %739 = vmatpush1.bf16.msra.mxu0 %v700
      %740 = vmatprep.subr.bf16.mxu0 0
      %741 = vmatpush1.bf16.msra.mxu0 %v701
      %742 = vmatprep.subr.bf16.mxu0 0
      %743 = vmatpush1.bf16.msra.mxu0 %v702
      %744 = vmatprep.subr.bf16.mxu0 0
      %745 = vmatpush1.bf16.msra.mxu0 %v703
      %746 = vmatprep.subr.bf16.mxu0 0
      %747 = vmatpush1.bf16.msra.mxu0 %v704
      %748 = vmatprep.subr.bf16.mxu0 0
      %749 = vmatpush1.bf16.msra.mxu0 %v705
      %750 = vmatprep.subr.bf16.mxu0 0
      %751 = vmatpush1.bf16.msra.mxu0 %v706
      %752 = vmatprep.subr.bf16.mxu0 0
      %753 = vmatpush1.bf16.msra.mxu0 %v707
      %754 = vmatprep.subr.bf16.mxu0 0
      %755 = vmatpush1.bf16.msra.mxu0 %v708
      %756 = vmatprep.subr.bf16.mxu0 0
      %757 = vmatpush1.bf16.msra.mxu0 %v709
      %758 = vmatprep.mubr.bf16.mxu0 %v406
      %759 = vmatmul.mubr.bf16.gmra.mrb[0].mxu0 %v405
      %v760 = vpop.f32.mrb[0].mxu0
      %v761 = vadd.f32 %v568, %v760
      %v762 = vpop.f32.mrb[0].mxu0
      %v763 = vpop.f32.mrb[0].mxu0
      %v764 = vadd.f32 %v571, %v763
      %v765 = vpop.f32.mrb[0].mxu0
      %766 = vmatprep.mubr.bf16.mxu0 %v408
      %767 = vmatmul.mubr.bf16.gmra.mrb[0].mxu0 %v407
      %v768 = vpop.f32.mrb[0].mxu0
      %v769 = vadd.f32 %v576, %v768
      %v770 = vpop.f32.mrb[0].mxu0
      %v771 = vpop.f32.mrb[0].mxu0
      %v772 = vadd.f32 %v579, %v771
      %v773 = vpop.f32.mrb[0].mxu0
      %774 = vmatprep.mubr.bf16.mxu0 %v410
      %775 = vmatmul.mubr.bf16.gmra.mrb[0].mxu0 %v409
      %v776 = vpop.f32.mrb[0].mxu0
      %v777 = vadd.f32 %v584, %v776
      %v778 = vpop.f32.mrb[0].mxu0
      %v779 = vpop.f32.mrb[0].mxu0
      %v780 = vadd.f32 %v587, %v779
      %v781 = vpop.f32.mrb[0].mxu0
      %782 = vmatprep.mubr.bf16.mxu0 %v412
      %783 = vmatmul.mubr.bf16.gmra.mrb[0].mxu0 %v411
      %v784 = vpop.f32.mrb[0].mxu0
      %v785 = vadd.f32 %v592, %v784
      %v786 = vpop.f32.mrb[0].mxu0
      %v787 = vpop.f32.mrb[0].mxu0
      %v788 = vadd.f32 %v595, %v787
      %v789 = vpop.f32.mrb[0].mxu0
      %790 = vmatprep.mubr.bf16.mxu0 %v414
      %791 = vmatmul.mubr.bf16.gmra.mrb[0].mxu0 %v413
      %v792 = vpop.f32.mrb[0].mxu0
      %v793 = vadd.f32 %v600, %v792
      %v794 = vpop.f32.mrb[0].mxu0
      %v795 = vpop.f32.mrb[0].mxu0
      %v796 = vadd.f32 %v603, %v795
      %v797 = vpop.f32.mrb[0].mxu0
      %798 = vmatprep.mubr.bf16.mxu0 %v416
      %799 = vmatmul.mubr.bf16.gmra.mrb[0].mxu0 %v415
      %v800 = vpop.f32.mrb[0].mxu0
      %v801 = vadd.f32 %v608, %v800
      %v802 = vpop.f32.mrb[0].mxu0
      %v803 = vpop.f32.mrb[0].mxu0
      %v804 = vadd.f32 %v611, %v803
      %v805 = vpop.f32.mrb[0].mxu0
      %806 = vmatprep.mubr.bf16.mxu0 %v418
      %807 = vmatmul.mubr.bf16.gmra.mrb[0].mxu0 %v417
      %v808 = vpop.f32.mrb[0].mxu0
      %v809 = vadd.f32 %v616, %v808
      %v810 = vpop.f32.mrb[0].mxu0
      %v811 = vpop.f32.mrb[0].mxu0
      %v812 = vadd.f32 %v619, %v811
      %v813 = vpop.f32.mrb[0].mxu0
      %814 = vmatprep.mubr.bf16.mxu0 %v420
      %815 = vmatmul.mubr.bf16.gmra.mrb[0].mxu0 %v419
      %v816 = vpop.f32.mrb[0].mxu0
      %v817 = vadd.f32 %v624, %v816
      %v818 = vpop.f32.mrb[0].mxu0
      %v819 = vpop.f32.mrb[0].mxu0
      %v820 = vadd.f32 %v627, %v819
      %v821 = vpop.f32.mrb[0].mxu0
      %822 = vdwg.mxu0
      %p823 = scmp.eq.s32.totalorder %s20, 0
      // Predicated region
      $region37: #{link_forward.1} parent=35 // pred_check
        %p824 = pneg %p823
      $region38: #{link_forward.1} parent=35 // pred_check_branch
        %826 = sbr.rel (%p824) target = $region40
      $region39: #{link_forward.1} parent=35 // pred_region
        %v827 = vld [vmem:[%s3] sm:$0x1]
        %v829 = vlaneseq
        %v830 = vshrl.u32 %v829, 7
        %v831 = vsub.s32 0, %v830
        %v832 = vrot.slane %v827, %v831
        %v834 = vadd.f32 %v761, %v832
        %v835 = vadd.f32 %v764, %v832
        %v836 = vadd.f32 %v769, %v832
        %v837 = vadd.f32 %v772, %v832
        %v838 = vadd.f32 %v777, %v832
        %v839 = vadd.f32 %v780, %v832
        %v840 = vadd.f32 %v785, %v832
        %v841 = vadd.f32 %v788, %v832
        %v842 = vadd.f32 %v793, %v832
        %v843 = vadd.f32 %v796, %v832
        %v844 = vadd.f32 %v801, %v832
        %v845 = vadd.f32 %v804, %v832
        %v846 = vadd.f32 %v809, %v832
        %v847 = vadd.f32 %v812, %v832
        %v848 = vadd.f32 %v817, %v832
        %v849 = vadd.f32 %v820, %v832
        %850 = vst [vmem:[%s274] sm:$0xff] %v834
        %851 = vst [vmem:[%s274 + $0x8] sm:$0xff] %v835
        %852 = vst [vmem:[%s274 + $0x10] sm:$0xff] %v836
        %853 = vst [vmem:[%s274 + $0x18] sm:$0xff] %v837
        %854 = vst [vmem:[%s274 + $0x20] sm:$0xff] %v838
        %855 = vst [vmem:[%s274 + $0x28] sm:$0xff] %v839
        %856 = vst [vmem:[%s274 + $0x30] sm:$0xff] %v840
        %857 = vst [vmem:[%s274 + $0x38] sm:$0xff] %v841
        %858 = vst [vmem:[%s274 + $0x40] sm:$0xff] %v842
        %859 = vst [vmem:[%s274 + $0x48] sm:$0xff] %v843
        %860 = vst [vmem:[%s274 + $0x50] sm:$0xff] %v844
        %861 = vst [vmem:[%s274 + $0x58] sm:$0xff] %v845
        %862 = vst [vmem:[%s274 + $0x60] sm:$0xff] %v846
        %863 = vst [vmem:[%s274 + $0x68] sm:$0xff] %v847
        %864 = vst [vmem:[%s274 + $0x70] sm:$0xff] %v848
        %865 = vst [vmem:[%s274 + $0x78] sm:$0xff] %v849
      $region40: #{link_forward.1} parent=35 // pred_fallthru
        _
      %p866 = scmp.gt.s32.totalorder %s20, 0
      // Predicated region
      $region41: #{link_forward.1} parent=35 // pred_check
        %p867 = pneg %p866
      $region42: #{link_forward.1} parent=35 // pred_check_branch
        %869 = sbr.rel (%p867) target = $region44
      $region43: #{link_forward.1} parent=35 // pred_region
        %v870 = vld [vmem:[%s274] sm:$0xff]
        %v871 = vld [vmem:[%s274 + $0x8] sm:$0xff]
        %v872 = vld [vmem:[%s274 + $0x10] sm:$0xff]
        %v873 = vld [vmem:[%s274 + $0x18] sm:$0xff]
        %v874 = vld [vmem:[%s274 + $0x20] sm:$0xff]
        %v875 = vld [vmem:[%s274 + $0x28] sm:$0xff]
        %v876 = vld [vmem:[%s274 + $0x30] sm:$0xff]
        %v877 = vld [vmem:[%s274 + $0x38] sm:$0xff]
        %v878 = vld [vmem:[%s274 + $0x40] sm:$0xff]
        %v879 = vld [vmem:[%s274 + $0x48] sm:$0xff]
        %v880 = vld [vmem:[%s274 + $0x50] sm:$0xff]
        %v881 = vld [vmem:[%s274 + $0x58] sm:$0xff]
        %v882 = vld [vmem:[%s274 + $0x60] sm:$0xff]
        %v883 = vld [vmem:[%s274 + $0x68] sm:$0xff]
        %v884 = vld [vmem:[%s274 + $0x70] sm:$0xff]
        %v885 = vld [vmem:[%s274 + $0x78] sm:$0xff]
        %v886 = vadd.f32 %v870, %v761
        %v887 = vadd.f32 %v871, %v764
        %v888 = vadd.f32 %v872, %v769
        %v889 = vadd.f32 %v873, %v772
        %v890 = vadd.f32 %v874, %v777
        %v891 = vadd.f32 %v875, %v780
        %v892 = vadd.f32 %v876, %v785
        %v893 = vadd.f32 %v877, %v788
        %v894 = vadd.f32 %v878, %v793
        %v895 = vadd.f32 %v879, %v796
        %v896 = vadd.f32 %v880, %v801
        %v897 = vadd.f32 %v881, %v804
        %v898 = vadd.f32 %v882, %v809
        %v899 = vadd.f32 %v883, %v812
        %v900 = vadd.f32 %v884, %v817
        %v901 = vadd.f32 %v885, %v820
        %902 = vst [vmem:[%s274] sm:$0xff] %v886
        %903 = vst [vmem:[%s274 + $0x8] sm:$0xff] %v887
        %904 = vst [vmem:[%s274 + $0x10] sm:$0xff] %v888
        %905 = vst [vmem:[%s274 + $0x18] sm:$0xff] %v889
        %906 = vst [vmem:[%s274 + $0x20] sm:$0xff] %v890
        %907 = vst [vmem:[%s274 + $0x28] sm:$0xff] %v891
        %908 = vst [vmem:[%s274 + $0x30] sm:$0xff] %v892
        %909 = vst [vmem:[%s274 + $0x38] sm:$0xff] %v893
        %910 = vst [vmem:[%s274 + $0x40] sm:$0xff] %v894
        %911 = vst [vmem:[%s274 + $0x48] sm:$0xff] %v895
        %912 = vst [vmem:[%s274 + $0x50] sm:$0xff] %v896
        %913 = vst [vmem:[%s274 + $0x58] sm:$0xff] %v897
        %914 = vst [vmem:[%s274 + $0x60] sm:$0xff] %v898
        %915 = vst [vmem:[%s274 + $0x68] sm:$0xff] %v899
        %916 = vst [vmem:[%s274 + $0x70] sm:$0xff] %v900
        %917 = vst [vmem:[%s274 + $0x78] sm:$0xff] %v901
      $region44: #{link_forward.1} parent=35 // pred_fallthru
        _
      %s918 = smul.u32 16, %s19
      %p919 = scmp.lt.s32.totalorder %s918, 31
      %s920 = scalar_select %p919, %s918, 31
      %s921 = smul.addr %s920, 8
      %s922 = scalar_lea.vmem %s4, %s921
      // Predicated region
      $region45: #{link_forward.1} parent=35 // pred_check
        %p923 = pneg %p146
      $region46: #{link_forward.1} parent=35 // pred_check_branch
        %925 = sbr.rel (%p923) target = $region48
      $region47: #{link_forward.1} parent=35 // pred_region
        %s926 = smul.u32 16, %s19
      $region48: #{link_forward.1} parent=35 // pred_fallthru
        _
    $region36: #{link_forward.1} parent=5 // pred_fallthru
      _
    %p927 = scmp.le.s32.totalorder 2, %s10
    // Predicated region
    $region49: #{link_forward.1} parent=5 // pred_check
      %p928 = pneg %p927
    $region50: #{link_forward.1} parent=5 // pred_check_branch
      %930 = sbr.rel (%p928) target = $region52
    $region51: #{link_forward.1} parent=5 // pred_region
      %s931 = ssub.s32 %s10, 2
      // Predicated region
      $region53: #{link_forward.1} parent=51 // pred_check
        %p932 = pneg %p152
      $region54: #{link_forward.1} parent=51 // pred_check_branch
        %934 = sbr.rel (%p932) target = $region56
      $region55: #{link_forward.1} parent=51 // pred_region
        %s935 = smul.u32 16, %s21
        %p936 = scmp.lt.s32.totalorder %s935, 31
        %s937 = scalar_select %p936, %s935, 31
        %s938 = smul.addr %s937, 8
        %s939 = scalar_lea.vmem %s4, %s938
      $region56: #{link_forward.1} parent=51 // pred_fallthru
        _
    $region52: #{link_forward.1} parent=5 // pred_fallthru
      _
  $region6: #{link_forward.1} parent=0 // loop_footer
    %s14 = sadd.s32 1, %s10
  $region7: #{link_forward.1} parent=0 // loop_footer_branch
    %9 = sbr.rel target = $region3
  $region8: #{link_forward.1} parent=0 // loop_exit
    _

</llo_original>
